<compile_context>
chip_gen: v6e
topology: v6e:2x2x1
jax: 0.10.0
libtpu: 0.0.40
codegen_flags: <defaults>
</compile_context>

<pallas_src>
import jax
import jax.numpy as jnp
from jax import lax
from jax.experimental import pallas as pl
from jax.experimental.pallas import tpu as pltpu

_LANE = 128


def _round_up(v, m):
    return ((v + m - 1) // m) * m


# --------------------------------------------------------------------------- #
# Stage 1: conv1 (+ optional 1x1 residual projection) + partial BN statistics.
# --------------------------------------------------------------------------- #
def _make_stage1(*, stride, Cin, L, Lout, Cpi, Cpo, has_proj, compute_dtype):
    span = (Lout - 1) * stride + 1

    def kernel(*refs):
        if has_proj:
            x_ref, w1_ref, wr_ref, y1_ref, r_ref, s1_ref, sr_ref, xs = refs
        else:
            x_ref, w1_ref, y1_ref, r_ref, s1_ref, xs = refs

        # NCL -> (L, C) inside VMEM; zero-pad L by 1 on each side and channels to
        # the lane-aligned Cpi.  The scratch is re-zeroed every grid step so the
        # kernel stays correct under "parallel" (megacore) grid semantics.
        x_t = x_ref[...].T                                    # (L, Cin) f32
        xs[...] = jnp.zeros(xs.shape, xs.dtype)
        xs[1:L + 1, :Cin] = x_t

        xv = xs[...]
        if stride == 1:
            taps = [xv[k:k + Lout, :] for k in range(3)]
        else:
            # TODO(synk): stride>1 path uses an in-kernel strided slice; prefer
            # DMA-side decimation via the index_map for large inputs.
            taps = [lax.slice(xv, (k, 0), (k + span, Cpi), (stride, 1))
                    for k in range(3)]

        # im2col: one fused MXU matmul (bf16 inputs, f32 accumulation).
        slab = jnp.concatenate(taps, axis=-1).astype(compute_dtype)   # (Lout, 3*Cpi)
        y1 = jnp.dot(slab, w1_ref[...], preferred_element_type=jnp.float32)
        y1_ref[...] = y1
        s1_ref[0:1, :] = jnp.sum(y1, axis=0, keepdims=True)
        s1_ref[1:2, :] = jnp.sum(y1 * y1, axis=0, keepdims=True)

        if has_proj:
            # taps[1] is exactly the strided, unpadded x -> 1x1 projection conv.
            r = jnp.dot(taps[1].astype(compute_dtype), wr_ref[...],
                        preferred_element_type=jnp.float32)
            r_ref[...] = r
            sr_ref[0:1, :] = jnp.sum(r, axis=0, keepdims=True)
            sr_ref[1:2, :] = jnp.sum(r * r, axis=0, keepdims=True)
        else:
            # Identity residual (stride==1, Cin==Cout): pass x through in f32.
            r_ref[...] = jnp.zeros(r_ref.shape, r_ref.dtype)
            r_ref[:, :Cin] = x_t

    return kernel


# --------------------------------------------------------------------------- #
# Stage 2: bn1 (folded scale/bias) + ReLU + conv2 + partial BN statistics.
# --------------------------------------------------------------------------- #
def _make_stage2(*, Lout, Cpo, compute_dtype):
    def kernel(y1_ref, sc1_ref, bi1_ref, w2_ref, y2_ref, s2_ref, hs):
        # Normalize conv1 output with the pre-folded BN affine, then ReLU.
        h = jnp.maximum(y1_ref[...] * sc1_ref[...] + bi1_ref[...], 0.0)  # (Lout, Cpo) f32

        # Zero-padded conv2 source lives in a VMEM scratch: only the two border
        # rows need zeroing (no jnp.concatenate re-pad / relayout copy).
        zrow = jnp.zeros((1, Cpo), jnp.float32)
        hs[0:1, :] = zrow
        hs[Lout + 1:Lout + 2, :] = zrow
        hs[1:Lout + 1, :] = h

        hv = hs[...]
        slab = jnp.concatenate(
            [hv[0:Lout, :], hv[1:Lout + 1, :], hv[2:Lout + 2, :]],
            axis=-1).astype(compute_dtype)                               # (Lout, 3*Cpo)
        y2 = jnp.dot(slab, w2_ref[...], preferred_element_type=jnp.float32)
        y2_ref[...] = y2
        s2_ref[0:1, :] = jnp.sum(y2, axis=0, keepdims=True)
        s2_ref[1:2, :] = jnp.sum(y2 * y2, axis=0, keepdims=True)

    return kernel


# --------------------------------------------------------------------------- #
# Stage 3: bn2 + res_norm (folded) + add + ReLU, store in PyTorch NCL layout.
# --------------------------------------------------------------------------- #
def _make_stage3(*, Cout, has_proj):
    def kernel(*refs):
        if has_proj:
            y2_ref, sc2_ref, bi2_ref, r_ref, scr_ref, bir_ref, out_ref = refs
        else:
            y2_ref, sc2_ref, bi2_ref, r_ref, out_ref = refs

        y2n = y2_ref[...] * sc2_ref[...] + bi2_ref[...]
        if has_proj:
            rn = r_ref[...] * scr_ref[...] + bir_ref[...]
        else:
            rn = r_ref[...]
        o = jnp.maximum(y2n + rn, 0.0)                        # (Lout, Cpo) f32
        # Back to NCL; drop the channel padding.
        out_ref[...] = o.T[:Cout, :].astype(out_ref.dtype)    # (Cout, Lout)

    return kernel


# --------------------------------------------------------------------------- #
# Glue: fold batch stats (sum, sumsq) + gamma/beta into per-channel scale/bias.
# --------------------------------------------------------------------------- #
def _fold_bn(stats, gamma_p, beta_p, count, eps):
    s = jnp.sum(stats, axis=0)                         # (2, Cp)
    mean = s[0] / count
    var = jnp.maximum(s[1] / count - mean * mean, 0.0)
    scale = gamma_p * lax.rsqrt(var + eps)
    bias = beta_p - mean * scale
    return scale[None, :], bias[None, :]               # each (1, Cp)


# --------------------------------------------------------------------------- #
# Host-facing forward.
# --------------------------------------------------------------------------- #
def resblock_forward(x, params, *, stride=1, eps=1e-5, compute_dtype=jnp.bfloat16):
    """x: (N, Cin, L) float32 (PyTorch NCL). Returns (N, Cout, Lout) float32."""
    N, Cin, L = x.shape
    Cout = params['w1'].shape[0]
    Lout = (L - 1) // stride + 1
    has_proj = 'wr' in params
    assert has_proj or (stride == 1 and Cin == Cout)

    Cpi = _round_up(Cin, _LANE)
    Cpo = _round_up(Cout, _LANE)

    # ---- pack parameters into lane-dense (channel-padded) kernel layouts ----
    def pack_conv(w, c_src_pad):          # (Cout, Cin_src, K) -> (K*c_src_pad, Cpo) bf16
        co, ci, k = w.shape
        wk = jnp.zeros((k, c_src_pad, Cpo), jnp.float32)
        wk = wk.at[:, :ci, :co].set(jnp.transpose(w, (2, 1, 0)))
        return wk.reshape(k * c_src_pad, Cpo).astype(compute_dtype)

    def pack_vec(v):
        return jnp.zeros((Cpo,), jnp.float32).at[:v.shape[0]].set(v)

    w1k = pack_conv(params['w1'], Cpi)                    # (3*Cpi, Cpo)
    w2k = pack_conv(params['w2'], Cpo)                    # (3*Cpo, Cpo)
    g1p, be1p = pack_vec(params['g1']), pack_vec(params['be1'])
    g2p, be2p = pack_vec(params['g2']), pack_vec(params['be2'])
    # NOTE: conv biases are dropped — they cancel exactly under training-mode BN.

    cp = pltpu.CompilerParams(
        dimension_semantics=("parallel",),                # batch tiles -> both TCs on v7x
        vmem_limit_bytes=32 * 1024 * 1024)                # explicit, v7x-safe (64 MiB phys)

    # ------------------------------- stage 1 ---------------------------------
    in_specs1 = [pl.BlockSpec((None, Cin, L), lambda i: (i, 0, 0)),
                 pl.BlockSpec((3 * Cpi, Cpo), lambda i: (0, 0))]
    args1 = [x.astype(jnp.float32), w1k]
    out_shape1 = [jax.ShapeDtypeStruct((N, Lout, Cpo), jnp.float32),   # y1 (pre-BN)
                  jax.ShapeDtypeStruct((N, Lout, Cpo), jnp.float32),   # residual (pre-BN)
                  jax.ShapeDtypeStruct((N, 2, Cpo), jnp.float32)]      # stats1 partials
    out_specs1 = [pl.BlockSpec((None, Lout, Cpo), lambda i: (i, 0, 0)),
                  pl.BlockSpec((None, Lout, Cpo), lambda i: (i, 0, 0)),
                  pl.BlockSpec((None, 2, Cpo), lambda i: (i, 0, 0))]
    if has_proj:
        wrk = pack_conv(params['wr'], Cpi)                # (Cpi, Cpo)
        in_specs1.append(pl.BlockSpec((Cpi, Cpo), lambda i: (0, 0)))
        args1.append(wrk)
        out_shape1.append(jax.ShapeDtypeStruct((N, 2, Cpo), jnp.float32))
        out_specs1.append(pl.BlockSpec((None, 2, Cpo), lambda i: (i, 0, 0)))

    res1 = pl.pallas_call(
        _make_stage1(stride=stride, Cin=Cin, L=L, Lout=Lout, Cpi=Cpi, Cpo=Cpo,
                     has_proj=has_proj, compute_dtype=compute_dtype),
        out_shape=tuple(out_shape1),
        grid=(N,),
        in_specs=in_specs1,
        out_specs=tuple(out_specs1),
        scratch_shapes=[pltpu.VMEM((L + 2, Cpi), jnp.float32)],
        compiler_params=cp,
    )(*args1)
    if has_proj:
        y1, r, stats1, stats_r = res1
    else:
        y1, r, stats1 = res1

    n_red = float(N * Lout)
    sc1, bi1 = _fold_bn(stats1, g1p, be1p, n_red, eps)

    # ------------------------------- stage 2 ---------------------------------
    y2, stats2 = pl.pallas_call(
        _make_stage2(Lout=Lout, Cpo=Cpo, compute_dtype=compute_dtype),
        out_shape=(jax.ShapeDtypeStruct((N, Lout, Cpo), jnp.float32),
                   jax.ShapeDtypeStruct((N, 2, Cpo), jnp.float32)),
        grid=(N,),
        in_specs=[pl.BlockSpec((None, Lout, Cpo), lambda i: (i, 0, 0)),
                  pl.BlockSpec((1, Cpo), lambda i: (0, 0)),
                  pl.BlockSpec((1, Cpo), lambda i: (0, 0)),
                  pl.BlockSpec((3 * Cpo, Cpo), lambda i: (0, 0))],
        out_specs=(pl.BlockSpec((None, Lout, Cpo), lambda i: (i, 0, 0)),
                   pl.BlockSpec((None, 2, Cpo), lambda i: (i, 0, 0))),
        scratch_shapes=[pltpu.VMEM((Lout + 2, Cpo), jnp.float32)],
        compiler_params=cp,
    )(y1, sc1, bi1, w2k)

    sc2, bi2 = _fold_bn(stats2, g2p, be2p, n_red, eps)

    # ------------------------------- stage 3 ---------------------------------
    args3 = [y2, sc2, bi2, r]
    in_specs3 = [pl.BlockSpec((None, Lout, Cpo), lambda i: (i, 0, 0)),
                 pl.BlockSpec((1, Cpo), lambda i: (0, 0)),
                 pl.BlockSpec((1, Cpo), lambda i: (0, 0)),
                 pl.BlockSpec((None, Lout, Cpo), lambda i: (i, 0, 0))]
    if has_proj:
        grp, berp = pack_vec(params['gr']), pack_vec(params['ber'])
        scr, bir = _fold_bn(stats_r, grp, berp, n_red, eps)
        args3 += [scr, bir]
        in_specs3 += [pl.BlockSpec((1, Cpo), lambda i: (0, 0)),
                      pl.BlockSpec((1, Cpo), lambda i: (0, 0))]

    out = pl.pallas_call(
        _make_stage3(Cout=Cout, has_proj=has_proj),
        out_shape=jax.ShapeDtypeStruct((N, Cout, Lout), jnp.float32),
        grid=(N,),
        in_specs=in_specs3,
        out_specs=pl.BlockSpec((None, Cout, Lout), lambda i: (i, 0, 0)),
        compiler_params=cp,
    )(*args3)
    return out


# --------------------------------------------------------------------------- #
# Parameters (PyTorch layouts) and a pure-JAX reference mirroring nn.Module.
# --------------------------------------------------------------------------- #
def make_params(key, num_ins, num_outs, stride=1):
    has_proj = (stride != 1) or (num_ins != num_outs)
    ks = jax.random.split(key, 12)

    def rnd(k, shape, scale=0.3):
        return (scale * jax.random.normal(k, shape)).astype(jnp.float32)

    p = dict(
        w1=rnd(ks[0], (num_outs, num_ins, 3)),
        b1=rnd(ks[1], (num_outs,)),
        g1=1.0 + rnd(ks[2], (num_outs,), 0.1),
        be1=rnd(ks[3], (num_outs,), 0.1),
        w2=rnd(ks[4], (num_outs, num_outs, 3)),
        b2=rnd(ks[5], (num_outs,)),
        g2=1.0 + rnd(ks[6], (num_outs,), 0.1),
        be2=rnd(ks[7], (num_outs,), 0.1),
    )
    if has_proj:
        p.update(
            wr=rnd(ks[8], (num_outs, num_ins, 1)),
            br=rnd(ks[9], (num_outs,)),
            gr=1.0 + rnd(ks[10], (num_outs,), 0.1),
            ber=rnd(ks[11], (num_outs,), 0.1),
        )
    return p


def resblock_ref(x, params, *, stride=1, eps=1e-5, compute_dtype=jnp.bfloat16):
    """Pure-JAX reference of the PyTorch forward (training-mode BN); matmul
    inputs are rounded to `compute_dtype` to mirror the kernel's bf16 MXU path."""
    has_proj = 'wr' in params

    def q(a):
        return a.astype(compute_dtype).astype(jnp.float32)

    def conv1d(x_, w, b, s, pad):
        y = lax.conv_general_dilated(q(x_), q(w), (s,), [(pad, pad)],
                                     dimension_numbers=('NCH', 'OIH', 'NCH'))
        return y + b[None, :, None]

    def bn(y, g, b):
        m = jnp.mean(y, axis=(0, 2), keepdims=True)
        v = jnp.mean((y - m) ** 2, axis=(0, 2), keepdims=True)
        return (y - m) * lax.rsqrt(v + eps) * g[None, :, None] + b[None, :, None]

    h = jax.nn.relu(bn(conv1d(x, params['w1'], params['b1'], stride, 1),
                       params['g1'], params['be1']))
    y2 = bn(conv1d(h, params['w2'], params['b2'], 1, 1), params['g2'], params['be2'])
    if has_proj:
        res = bn(conv1d(x, params['wr'], params['br'], stride, 0),
                 params['gr'], params['ber'])
    else:
        res = x
    return jax.nn.relu(y2 + res)


if __name__ == "__main__":
    key = jax.random.PRNGKey(0)
    k1, k2, k3, k4 = jax.random.split(key, 4)

    # Case 1: projection residual (Cin != Cout).
    N, Cin, Cout, L, stride = 2, 4, 8, 16, 1
    x = jax.random.normal(k1, (N, Cin, L), dtype=jnp.float32)
    params = make_params(k2, Cin, Cout, stride)

    out = jax.block_until_ready(resblock_forward(x, params, stride=stride))
    ref = jax.block_until_ready(resblock_ref(x, params, stride=stride))
    assert out.shape == (N, Cout, (L - 1) // stride + 1), out.shape
    assert jnp.allclose(out, ref, rtol=1e-2, atol=1e-2), \
        float(jnp.max(jnp.abs(out - ref)))

    # Case 2: identity residual (Cin == Cout, stride == 1) — no projection args.
    N2, C2, L2 = 2, 8, 16
    x2 = jax.random.normal(k3, (N2, C2, L2), dtype=jnp.float32)
    params2 = make_params(k4, C2, C2, 1)

    out2 = jax.block_until_ready(resblock_forward(x2, params2, stride=1))
    ref2 = jax.block_until_ready(resblock_ref(x2, params2, stride=1))
    assert out2.shape == (N2, C2, L2), out2.shape
    assert jnp.allclose(out2, ref2, rtol=1e-2, atol=1e-2), \
        float(jnp.max(jnp.abs(out2 - ref2)))

    print("KERNEL_OK")
</pallas_src>

<mosaic_0001>
module attributes {stable_mosaic.version = 11 : i64} {
  func.func @kernel(%arg0: i32, %arg1: memref<1x4x16xf32, #tpu.memory_space<vmem>>, %arg2: memref<384x128xbf16, #tpu.memory_space<vmem>>, %arg3: memref<128x128xbf16, #tpu.memory_space<vmem>>, %arg4: memref<1x16x128xf32, #tpu.memory_space<vmem>>, %arg5: memref<1x16x128xf32, #tpu.memory_space<vmem>>, %arg6: memref<1x2x128xf32, #tpu.memory_space<vmem>>, %arg7: memref<1x2x128xf32, #tpu.memory_space<vmem>>, %arg8: memref<18x128xf32, #tpu.memory_space<vmem>>) attributes {dimension_semantics = [#tpu.dimension_semantics<parallel>], iteration_bounds = array<i64: 2>, scalar_prefetch = 0 : i64, scratch_operands = 1 : i64, tpu.core_type = #tpu.core_type<tc>, window_params = [{transform_indices = @transform_0, window_bounds = array<i64: 1, 4, 16>}, {pipeline_mode = #tpu.pipeline_mode<synchronous>, transform_indices = @transform_1, window_bounds = array<i64: 384, 128>}, {pipeline_mode = #tpu.pipeline_mode<synchronous>, transform_indices = @transform_2, window_bounds = array<i64: 128, 128>}, {transform_indices = @transform_3, window_bounds = array<i64: 1, 16, 128>}, {transform_indices = @transform_4, window_bounds = array<i64: 1, 16, 128>}, {transform_indices = @transform_5, window_bounds = array<i64: 1, 2, 128>}, {transform_indices = @transform_6, window_bounds = array<i64: 1, 2, 128>}]} {
    %c0 = arith.constant 0 : index
    %c0_0 = arith.constant 0 : index
    %c0_1 = arith.constant 0 : index
    %0 = vector.load %arg1[%c0, %c0_0, %c0_1] : memref<1x4x16xf32, #tpu.memory_space<vmem>>, vector<1x4x16xf32>
    %1 = vector.shape_cast %0 : vector<1x4x16xf32> to vector<4x16xf32>
    %2 = tpu.transpose %1, [1, 0] : vector<4x16xf32> -> vector<16x4xf32>
    %cst = arith.constant 0.000000e+00 : f32
    %3 = vector.broadcast %cst : f32 to vector<18x128xf32>
    %c0_2 = arith.constant 0 : index
    %c0_3 = arith.constant 0 : index
    %4 = vector.load %arg8[%c0_2, %c0_3] : memref<18x128xf32, #tpu.memory_space<vmem>>, vector<18x128xf32>
    tpu.vector_store %arg8[%c0_2, %c0_3], %3 {strides = array<i32>} : memref<18x128xf32, #tpu.memory_space<vmem>>, vector<18x128xf32>,
    %c1 = arith.constant 1 : index
    %c0_4 = arith.constant 0 : index
    %5 = vector.load %arg8[%c1, %c0_4] : memref<18x128xf32, #tpu.memory_space<vmem>>, vector<16x4xf32>
    tpu.vector_store %arg8[%c1, %c0_4], %2 {strides = array<i32>} : memref<18x128xf32, #tpu.memory_space<vmem>>, vector<16x4xf32>,
    %c0_5 = arith.constant 0 : index
    %c0_6 = arith.constant 0 : index
    %6 = vector.load %arg8[%c0_5, %c0_6] : memref<18x128xf32, #tpu.memory_space<vmem>>, vector<18x128xf32>
    %7 = vector.extract_strided_slice %6 {offsets = [0, 0], sizes = [16, 128], strides = [1, 1]} : vector<18x128xf32> to vector<16x128xf32>
    %8 = vector.extract_strided_slice %6 {offsets = [1, 0], sizes = [16, 128], strides = [1, 1]} : vector<18x128xf32> to vector<16x128xf32>
    %9 = vector.extract_strided_slice %6 {offsets = [2, 0], sizes = [16, 128], strides = [1, 1]} : vector<18x128xf32> to vector<16x128xf32>
    %10 = tpu.concatenate %7, %8, %9 in 1 : vector<16x128xf32>, vector<16x128xf32>, vector<16x128xf32> -> vector<16x384xf32>
    %11 = arith.truncf %10 : vector<16x384xf32> to vector<16x384xbf16>
    %c0_7 = arith.constant 0 : index
    %c0_8 = arith.constant 0 : index
    %12 = vector.load %arg2[%c0_7, %c0_8] : memref<384x128xbf16, #tpu.memory_space<vmem>>, vector<384x128xbf16>
    %cst_9 = arith.constant dense<0.000000e+00> : vector<16x128xf32>
    %13 = tpu.matmul %11, %12, %cst_9 {dimension_numbers = #tpu.dot_dimension_numbers<[1], [0], [0], [1], [0, 0, 1, 1], [], []>} : vector<16x384xbf16>, vector<384x128xbf16>, vector<16x128xf32> -> vector<16x128xf32>
    %c0_10 = arith.constant 0 : index
    %c0_11 = arith.constant 0 : index
    %c0_12 = arith.constant 0 : index
    %14 = vector.load %arg4[%c0_10, %c0_11, %c0_12] : memref<1x16x128xf32, #tpu.memory_space<vmem>>, vector<1x16x128xf32>
    %15 = vector.shape_cast %14 : vector<1x16x128xf32> to vector<16x128xf32>
    %16 = vector.shape_cast %13 : vector<16x128xf32> to vector<1x16x128xf32>
    tpu.vector_store %arg4[%c0_10, %c0_11, %c0_12], %16 {strides = array<i32>} : memref<1x16x128xf32, #tpu.memory_space<vmem>>, vector<1x16x128xf32>,
    %cst_13 = arith.constant dense<0.000000e+00> : vector<128xf32>
    %17 = vector.multi_reduction <add>, %13, %cst_13 [0] : vector<16x128xf32> to vector<128xf32>
    %18 = vector.shape_cast %17 : vector<128xf32> to vector<1x128xf32>
    %c0_14 = arith.constant 0 : index
    %c0_15 = arith.constant 0 : index
    %c0_16 = arith.constant 0 : index
    %19 = vector.load %arg6[%c0_14, %c0_15, %c0_16] : memref<1x2x128xf32, #tpu.memory_space<vmem>>, vector<1x1x128xf32>
    %20 = vector.shape_cast %19 : vector<1x1x128xf32> to vector<1x128xf32>
    %21 = vector.shape_cast %18 : vector<1x128xf32> to vector<1x1x128xf32>
    tpu.vector_store %arg6[%c0_14, %c0_15, %c0_16], %21 {strides = array<i32>} : memref<1x2x128xf32, #tpu.memory_space<vmem>>, vector<1x1x128xf32>,
    %22 = arith.mulf %13, %13 : vector<16x128xf32>
    %cst_17 = arith.constant dense<0.000000e+00> : vector<128xf32>
    %23 = vector.multi_reduction <add>, %22, %cst_17 [0] : vector<16x128xf32> to vector<128xf32>
    %24 = vector.shape_cast %23 : vector<128xf32> to vector<1x128xf32>
    %c0_18 = arith.constant 0 : index
    %c1_19 = arith.constant 1 : index
    %c0_20 = arith.constant 0 : index
    %25 = vector.load %arg6[%c0_18, %c1_19, %c0_20] : memref<1x2x128xf32, #tpu.memory_space<vmem>>, vector<1x1x128xf32>
    %26 = vector.shape_cast %25 : vector<1x1x128xf32> to vector<1x128xf32>
    %27 = vector.shape_cast %24 : vector<1x128xf32> to vector<1x1x128xf32>
    tpu.vector_store %arg6[%c0_18, %c1_19, %c0_20], %27 {strides = array<i32>} : memref<1x2x128xf32, #tpu.memory_space<vmem>>, vector<1x1x128xf32>,
    %28 = arith.truncf %8 : vector<16x128xf32> to vector<16x128xbf16>
    %c0_21 = arith.constant 0 : index
    %c0_22 = arith.constant 0 : index
    %29 = vector.load %arg3[%c0_21, %c0_22] : memref<128x128xbf16, #tpu.memory_space<vmem>>, vector<128x128xbf16>
    %cst_23 = arith.constant dense<0.000000e+00> : vector<16x128xf32>
    %30 = tpu.matmul %28, %29, %cst_23 {dimension_numbers = #tpu.dot_dimension_numbers<[1], [0], [0], [1], [0, 0, 1, 1], [], []>} : vector<16x128xbf16>, vector<128x128xbf16>, vector<16x128xf32> -> vector<16x128xf32>
    %c0_24 = arith.constant 0 : index
    %c0_25 = arith.constant 0 : index
    %c0_26 = arith.constant 0 : index
    %31 = vector.load %arg5[%c0_24, %c0_25, %c0_26] : memref<1x16x128xf32, #tpu.memory_space<vmem>>, vector<1x16x128xf32>
    %32 = vector.shape_cast %31 : vector<1x16x128xf32> to vector<16x128xf32>
    %33 = vector.shape_cast %30 : vector<16x128xf32> to vector<1x16x128xf32>
    tpu.vector_store %arg5[%c0_24, %c0_25, %c0_26], %33 {strides = array<i32>} : memref<1x16x128xf32, #tpu.memory_space<vmem>>, vector<1x16x128xf32>,
    %cst_27 = arith.constant dense<0.000000e+00> : vector<128xf32>
    %34 = vector.multi_reduction <add>, %30, %cst_27 [0] : vector<16x128xf32> to vector<128xf32>
    %35 = vector.shape_cast %34 : vector<128xf32> to vector<1x128xf32>
    %c0_28 = arith.constant 0 : index
    %c0_29 = arith.constant 0 : index
    %c0_30 = arith.constant 0 : index
    %36 = vector.load %arg7[%c0_28, %c0_29, %c0_30] : memref<1x2x128xf32, #tpu.memory_space<vmem>>, vector<1x1x128xf32>
    %37 = vector.shape_cast %36 : vector<1x1x128xf32> to vector<1x128xf32>
    %38 = vector.shape_cast %35 : vector<1x128xf32> to vector<1x1x128xf32>
    tpu.vector_store %arg7[%c0_28, %c0_29, %c0_30], %38 {strides = array<i32>} : memref<1x2x128xf32, #tpu.memory_space<vmem>>, vector<1x1x128xf32>,
    %39 = arith.mulf %30, %30 : vector<16x128xf32>
    %cst_31 = arith.constant dense<0.000000e+00> : vector<128xf32>
    %40 = vector.multi_reduction <add>, %39, %cst_31 [0] : vector<16x128xf32> to vector<128xf32>
    %41 = vector.shape_cast %40 : vector<128xf32> to vector<1x128xf32>
    %c0_32 = arith.constant 0 : index
    %c1_33 = arith.constant 1 : index
    %c0_34 = arith.constant 0 : index
    %42 = vector.load %arg7[%c0_32, %c1_33, %c0_34] : memref<1x2x128xf32, #tpu.memory_space<vmem>>, vector<1x1x128xf32>
    %43 = vector.shape_cast %42 : vector<1x1x128xf32> to vector<1x128xf32>
    %44 = vector.shape_cast %41 : vector<1x128xf32> to vector<1x1x128xf32>
    tpu.vector_store %arg7[%c0_32, %c1_33, %c0_34], %44 {strides = array<i32>} : memref<1x2x128xf32, #tpu.memory_space<vmem>>, vector<1x1x128xf32>,
    return
  }
  func.func @transform_0(%arg0: i32) -> (i32, i32, i32) {
    %c0_i32 = arith.constant 0 : i32
    %c0_i32_0 = arith.constant 0 : i32
    %c0_i32_1 = arith.constant 0 : i32
    return %arg0, %c0_i32, %c0_i32_0 : i32, i32, i32
  }
  func.func @transform_1(%arg0: i32) -> (i32, i32) {
    %c0_i32 = arith.constant 0 : i32
    %c0_i32_0 = arith.constant 0 : i32
    %c0_i32_1 = arith.constant 0 : i32
    return %c0_i32, %c0_i32_0 : i32, i32
  }
  func.func @transform_2(%arg0: i32) -> (i32, i32) {
    %c0_i32 = arith.constant 0 : i32
    %c0_i32_0 = arith.constant 0 : i32
    %c0_i32_1 = arith.constant 0 : i32
    return %c0_i32, %c0_i32_0 : i32, i32
  }
  func.func @transform_3(%arg0: i32) -> (i32, i32, i32) {
    %c0_i32 = arith.constant 0 : i32
    %c0_i32_0 = arith.constant 0 : i32
    %c0_i32_1 = arith.constant 0 : i32
    return %arg0, %c0_i32, %c0_i32_0 : i32, i32, i32
  }
  func.func @transform_4(%arg0: i32) -> (i32, i32, i32) {
    %c0_i32 = arith.constant 0 : i32
    %c0_i32_0 = arith.constant 0 : i32
    %c0_i32_1 = arith.constant 0 : i32
    return %arg0, %c0_i32, %c0_i32_0 : i32, i32, i32
  }
  func.func @transform_5(%arg0: i32) -> (i32, i32, i32) {
    %c0_i32 = arith.constant 0 : i32
    %c0_i32_0 = arith.constant 0 : i32
    %c0_i32_1 = arith.constant 0 : i32
    return %arg0, %c0_i32, %c0_i32_0 : i32, i32, i32
  }
  func.func @transform_6(%arg0: i32) -> (i32, i32, i32) {
    %c0_i32 = arith.constant 0 : i32
    %c0_i32_0 = arith.constant 0 : i32
    %c0_i32_1 = arith.constant 0 : i32
    return %arg0, %c0_i32, %c0_i32_0 : i32, i32, i32
  }
}

</mosaic_0001>

<llo_original>
// kernel: tpu_custom_call.1
$region0: #{tpu_custom_call.1}
  #allocation0 [shape = 'u32[]', space=smem, size = 0x4, offset = 0x4, fixed_abs, tag = 'smem constant byte address 0x4 - core index']
  #allocation1 [shape = 'u32[144,128]{1,0:T(1,128)}', space=vmem, size = 0x12000, scoped, tag = 'internal scratch']
  #allocation2 [shape = 'f32[18,128]{1,0:T(8,128)}', space=vmem, size = 0x3000, scoped, tag = 'scratch operand']
  %s0 = inlined_call_operand.hbm [shape: f32[2,4,16], index: 0, kind: input, shape index: {}]
  %s1 = inlined_call_operand.hbm [shape: bf16[384,128], index: 1, kind: input, shape index: {}]
  %s2 = inlined_call_operand.hbm [shape: bf16[128,128], index: 2, kind: input, shape index: {}]
  %s3 = inlined_call_operand.hbm [shape: f32[2,16,128], index: 3, kind: output, shape index: {0}]
  %s4 = inlined_call_operand.hbm [shape: f32[2,16,128], index: 4, kind: output, shape index: {1}]
  %s5 = inlined_call_operand.hbm [shape: f32[2,2,128], index: 5, kind: output, shape index: {2}]
  %s6 = inlined_call_operand.hbm [shape: f32[2,2,128], index: 6, kind: output, shape index: {3}]
  %7 = xla_tuple %s3, %s4, %s5, %s6
  %s8 = sld [smem:[#allocation0]]
  $region81: #{tpu_custom_call.1} parent=0
    _
  %s10 = ssub.s32 1, %s8
  %s11 = scalar_select 0, %s10, %s8
  $region1: #{tpu_custom_call.1} parent=0
    #allocation3 [shape = 'u8[4096]{0}', space=vmem, size = 0x1000, scoped, tag = 'input window, operand 0']
    #allocation4 [shape = 's32[2]{0}', space=sflag, size = 0x8, scoped, tag = 'scoped memory for tpu_custom_call.1']
    #allocation5 [shape = 's32[2]{0}', space=sflag, size = 0x8, scoped, tag = 'scoped memory for tpu_custom_call.1']
    #allocation6 [shape = 'u8[98304]{0}', space=vmem, size = 0x18000, scoped, tag = 'input window, operand 1, single buffered']
    #allocation7 [shape = 's32[1]{0}', space=sflag, size = 0x4, scoped, tag = 'scoped memory for tpu_custom_call.1']
    #allocation8 [shape = 'u8[32768]{0}', space=vmem, size = 0x8000, scoped, tag = 'input window, operand 2, single buffered']
    #allocation9 [shape = 'u8[16384]{0}', space=vmem, size = 0x4000, scoped, tag = 'output window, operand 0']
    #allocation10 [shape = 'u8[16384]{0}', space=vmem, size = 0x4000, scoped, tag = 'output window, operand 1']
    #allocation11 [shape = 's32[2]{0}', space=sflag, size = 0x8, scoped, tag = 'scoped memory for tpu_custom_call.1']
    #allocation12 [shape = 'u8[2048]{0}', space=vmem, size = 0x800, scoped, tag = 'output window, operand 2']
    #allocation13 [shape = 'u8[2048]{0}', space=vmem, size = 0x800, scoped, tag = 'output window, operand 3']
    #allocation14 [shape = 's32[2]{0}', space=sflag, size = 0x8, scoped, tag = 'scoped memory for tpu_custom_call.1']
    %12 = vsyncpa [#allocation4], 0
    %s13 = scalar_lea.sflag [#allocation4], 1
    %14 = vsyncpa %s13, 0
    %15 = vsyncpa [#allocation7], 0
    %16 = vsyncpa [#allocation5], 0
    %s17 = scalar_lea.sflag [#allocation5], 1
    %18 = vsyncpa %s17, 0
    %19 = vsyncpa [#allocation11], 0
    %s20 = scalar_lea.sflag [#allocation11], 1
    %21 = vsyncpa %s20, 0
    %22 = vsyncpa [#allocation14], 0
    %s23 = scalar_lea.sflag [#allocation14], 1
    %24 = vsyncpa %s23, 0
    loop: start=0, step=1, limit=4
    $region2: #{tpu_custom_call.1} parent=1 // loop_pre_header
      _
    $region3: #{tpu_custom_call.1} parent=1 // loop_header
      %s26 = sphi 0, %s30
      %p27 = scmp.ge.s32.totalorder %s26, 4
      %s36 = sphi 0, %s38
      %s39 = sphi 0, %s36
      %s40 = sphi 0, %s39
      %s56 = sphi 0, %s40
      %s60 = sphi 0, %s60
      %s62 = sphi 0, %s60
      %s63 = sphi 0, %s62
      %s77 = sphi 0, %s63
      %s81 = sphi 0, %s81
      %s83 = sphi 0, %s81
      %s84 = sphi 0, %s83
      %s98 = sphi 0, %s84
      %s104 = sphi 0, %s106
      %s107 = sphi 0, %s104
      %s108 = sphi 0, %s107
      %s124 = sphi 0, %s108
      %s130 = sphi 0, %s132
      %s133 = sphi 0, %s130
      %s134 = sphi 0, %s133
      %s150 = sphi 0, %s134
      %s156 = sphi 0, %s158
      %s159 = sphi 0, %s156
      %s160 = sphi 0, %s159
      %s176 = sphi 0, %s160
      %s182 = sphi 0, %s184
      %s185 = sphi 0, %s182
      %s186 = sphi 0, %s185
      %s202 = sphi 0, %s186
    $region4: #{tpu_custom_call.1} parent=1 // loop_header_branch
      %29 = sbr.rel (%p27) target = $region8
    $region5: #{tpu_custom_call.1} parent=1 // loop_body
      %s31 = ssub.s32 %s26, 1
      %s32 = ssub.s32 %s26, 2
      %s33 = sadd.s32 %s26, 1
      %s34 = ssub.s32 %s26, %s33
      %p35 = scmp.eq.s32.totalorder %s34, 0
      %s37 = sadd.s32 %s36, 1
      %s38 = scalar_select %p35, %s36, %s37
      %p41 = pneg %p35
      %p42 = scmp.eq.s32.totalorder %s26, 1
      %p43 = por %p41, %p42
      %p44 = scmp.ne.s32.totalorder %s36, %s39
      %p45 = scmp.eq.s32.totalorder %s26, 0
      %p46 = por %p44, %p45
      %p47 = scmp.ne.s32.totalorder %s36, %s39
      %p48 = scmp.eq.s32.totalorder %s31, 1
      %p49 = por %p47, %p48
      %p50 = scmp.ne.s32.totalorder %s39, %s40
      %p51 = scmp.eq.s32.totalorder %s31, 0
      %p52 = por %p50, %p51
      %p53 = scmp.ne.s32.totalorder %s39, %s40
      %p54 = scmp.eq.s32.totalorder %s32, 1
      %p55 = por %p53, %p54
      %p57 = scmp.ne.s32.totalorder %s40, %s56
      %p58 = scmp.eq.s32.totalorder %s32, 0
      %p59 = por %p57, %p58
      %s61 = sadd.s32 %s60, 1
      %p64 = scmp.eq.s32.totalorder %s26, 1
      %p65 = scmp.ne.s32.totalorder %s60, %s62
      %p66 = scmp.eq.s32.totalorder %s26, 0
      %p67 = por %p65, %p66
      %p68 = scmp.ne.s32.totalorder %s60, %s62
      %p69 = scmp.eq.s32.totalorder %s31, 1
      %p70 = por %p68, %p69
      %p71 = scmp.ne.s32.totalorder %s62, %s63
      %p72 = scmp.eq.s32.totalorder %s31, 0
      %p73 = por %p71, %p72
      %p74 = scmp.ne.s32.totalorder %s62, %s63
      %p75 = scmp.eq.s32.totalorder %s32, 1
      %p76 = por %p74, %p75
      %p78 = scmp.ne.s32.totalorder %s63, %s77
      %p79 = scmp.eq.s32.totalorder %s32, 0
      %p80 = por %p78, %p79
      %s82 = sadd.s32 %s81, 1
      %p85 = scmp.eq.s32.totalorder %s26, 1
      %p86 = scmp.ne.s32.totalorder %s81, %s83
      %p87 = scmp.eq.s32.totalorder %s26, 0
      %p88 = por %p86, %p87
      %p89 = scmp.ne.s32.totalorder %s81, %s83
      %p90 = scmp.eq.s32.totalorder %s31, 1
      %p91 = por %p89, %p90
      %p92 = scmp.ne.s32.totalorder %s83, %s84
      %p93 = scmp.eq.s32.totalorder %s31, 0
      %p94 = por %p92, %p93
      %p95 = scmp.ne.s32.totalorder %s83, %s84
      %p96 = scmp.eq.s32.totalorder %s32, 1
      %p97 = por %p95, %p96
      %p99 = scmp.ne.s32.totalorder %s84, %s98
      %p100 = scmp.eq.s32.totalorder %s32, 0
      %p101 = por %p99, %p100
      %s102 = ssub.s32 %s26, %s33
      %p103 = scmp.eq.s32.totalorder %s102, 0
      %s105 = sadd.s32 %s104, 1
      %s106 = scalar_select %p103, %s104, %s105
      %p109 = pneg %p103
      %p110 = scmp.eq.s32.totalorder %s26, 1
      %p111 = por %p109, %p110
      %p112 = scmp.ne.s32.totalorder %s104, %s107
      %p113 = scmp.eq.s32.totalorder %s26, 0
      %p114 = por %p112, %p113
      %p115 = scmp.ne.s32.totalorder %s104, %s107
      %p116 = scmp.eq.s32.totalorder %s31, 1
      %p117 = por %p115, %p116
      %p118 = scmp.ne.s32.totalorder %s107, %s108
      %p119 = scmp.eq.s32.totalorder %s31, 0
      %p120 = por %p118, %p119
      %p121 = scmp.ne.s32.totalorder %s107, %s108
      %p122 = scmp.eq.s32.totalorder %s32, 1
      %p123 = por %p121, %p122
      %p125 = scmp.ne.s32.totalorder %s108, %s124
      %p126 = scmp.eq.s32.totalorder %s32, 0
      %p127 = por %p125, %p126
      %s128 = ssub.s32 %s26, %s33
      %p129 = scmp.eq.s32.totalorder %s128, 0
      %s131 = sadd.s32 %s130, 1
      %s132 = scalar_select %p129, %s130, %s131
      %p135 = pneg %p129
      %p136 = scmp.eq.s32.totalorder %s26, 1
      %p137 = por %p135, %p136
      %p138 = scmp.ne.s32.totalorder %s130, %s133
      %p139 = scmp.eq.s32.totalorder %s26, 0
      %p140 = por %p138, %p139
      %p141 = scmp.ne.s32.totalorder %s130, %s133
      %p142 = scmp.eq.s32.totalorder %s31, 1
      %p143 = por %p141, %p142
      %p144 = scmp.ne.s32.totalorder %s133, %s134
      %p145 = scmp.eq.s32.totalorder %s31, 0
      %p146 = por %p144, %p145
      %p147 = scmp.ne.s32.totalorder %s133, %s134
      %p148 = scmp.eq.s32.totalorder %s32, 1
      %p149 = por %p147, %p148
      %p151 = scmp.ne.s32.totalorder %s134, %s150
      %p152 = scmp.eq.s32.totalorder %s32, 0
      %p153 = por %p151, %p152
      %s154 = ssub.s32 %s26, %s33
      %p155 = scmp.eq.s32.totalorder %s154, 0
      %s157 = sadd.s32 %s156, 1
      %s158 = scalar_select %p155, %s156, %s157
      %p161 = pneg %p155
      %p162 = scmp.eq.s32.totalorder %s26, 1
      %p163 = por %p161, %p162
      %p164 = scmp.ne.s32.totalorder %s156, %s159
      %p165 = scmp.eq.s32.totalorder %s26, 0
      %p166 = por %p164, %p165
      %p167 = scmp.ne.s32.totalorder %s156, %s159
      %p168 = scmp.eq.s32.totalorder %s31, 1
      %p169 = por %p167, %p168
      %p170 = scmp.ne.s32.totalorder %s159, %s160
      %p171 = scmp.eq.s32.totalorder %s31, 0
      %p172 = por %p170, %p171
      %p173 = scmp.ne.s32.totalorder %s159, %s160
      %p174 = scmp.eq.s32.totalorder %s32, 1
      %p175 = por %p173, %p174
      %p177 = scmp.ne.s32.totalorder %s160, %s176
      %p178 = scmp.eq.s32.totalorder %s32, 0
      %p179 = por %p177, %p178
      %s180 = ssub.s32 %s26, %s33
      %p181 = scmp.eq.s32.totalorder %s180, 0
      %s183 = sadd.s32 %s182, 1
      %s184 = scalar_select %p181, %s182, %s183
      %p187 = pneg %p181
      %p188 = scmp.eq.s32.totalorder %s26, 1
      %p189 = por %p187, %p188
      %p190 = scmp.ne.s32.totalorder %s182, %s185
      %p191 = scmp.eq.s32.totalorder %s26, 0
      %p192 = por %p190, %p191
      %p193 = scmp.ne.s32.totalorder %s182, %s185
      %p194 = scmp.eq.s32.totalorder %s31, 1
      %p195 = por %p193, %p194
      %p196 = scmp.ne.s32.totalorder %s185, %s186
      %p197 = scmp.eq.s32.totalorder %s31, 0
      %p198 = por %p196, %p197
      %p199 = scmp.ne.s32.totalorder %s185, %s186
      %p200 = scmp.eq.s32.totalorder %s32, 1
      %p201 = por %p199, %p200
      %p203 = scmp.ne.s32.totalorder %s186, %s202
      %p204 = scmp.eq.s32.totalorder %s32, 0
      %p205 = por %p203, %p204
      %p206 = scmp.le.s32.totalorder 1, %s26
      %p207 = scmp.lt.s32.totalorder %s26, 3
      %p208 = pnand %p206, %p207
      %p209 = pneg %p208
      // Predicated region
      $region9: #{tpu_custom_call.1} parent=5 // pred_check
        _
      $region10: #{tpu_custom_call.1} parent=5 // pred_check_branch
        %211 = sbr.rel (%p208) target = $region12
      $region11: #{tpu_custom_call.1} parent=5 // pred_region
        %s212 = ssub.s32 %s26, 1
        // Predicated region
        $region13: #{tpu_custom_call.1} parent=11 // pred_check
          %p213 = pneg %p73
        $region14: #{tpu_custom_call.1} parent=11 // pred_check_branch
          %215 = sbr.rel (%p213) target = $region16
        $region15: #{tpu_custom_call.1} parent=11 // pred_region
          %s217 = ssub.s32 3072, 3072
          %218 = vsyncadd [#allocation7], %s217
          %s219 = sshll.u32 [#allocation6], 4
          %s220 = int_to_ptr.vmem [resolvable:$true] %s219
          %225 = dma.hbm_to_vmem [thread:$0]  %s1, 3072, %s220, [#allocation7], 64, 64, 4
        $region16: #{tpu_custom_call.1} parent=11 // pred_fallthru
          _
        // Predicated region
        $region17: #{tpu_custom_call.1} parent=11 // pred_check
          %p226 = pneg %p94
        $region18: #{tpu_custom_call.1} parent=11 // pred_check_branch
          %228 = sbr.rel (%p226) target = $region20
        $region19: #{tpu_custom_call.1} parent=11 // pred_region
          %s230 = ssub.s32 1024, 1024
          %231 = vsyncadd [#allocation7], %s230
          %s232 = sshll.u32 [#allocation8], 4
          %s233 = int_to_ptr.vmem [resolvable:$true] %s232
          %238 = dma.hbm_to_vmem [thread:$0]  %s2, 1024, %s233, [#allocation7], 64, 64, 4
        $region20: #{tpu_custom_call.1} parent=11 // pred_fallthru
          _
      $region12: #{tpu_custom_call.1} parent=5 // pred_fallthru
        _
      %p239 = scmp.lt.s32.totalorder %s26, 2
      // Predicated region
      $region21: #{tpu_custom_call.1} parent=5 // pred_check
        %p240 = pneg %p239
      $region22: #{tpu_custom_call.1} parent=5 // pred_check_branch
        %242 = sbr.rel (%p240) target = $region24
      $region23: #{tpu_custom_call.1} parent=5 // pred_region
        // Predicated region
        $region25: #{tpu_custom_call.1} parent=23 // pred_check
          %p243 = pneg %p46
        $region26: #{tpu_custom_call.1} parent=23 // pred_check_branch
          %245 = sbr.rel (%p243) target = $region28
        $region27: #{tpu_custom_call.1} parent=23 // pred_region
          %s246 = sand.u32 %s36, 1
          %s247 = scalar_lea.sflag [#allocation4], %s246
          %s248 = sand.u32 %s36, 1
          %s249 = smul.addr %s248, 4
          %s250 = scalar_lea.vmem [#allocation3], %s249
          %s252 = ssub.s32 64, 64
          %253 = vsyncadd %s247, %s252
          %s254 = smul.addr %s26, 64
          %s255 = scalar_lea.hbm %s0, %s254
          %s257 = sshll.u32 %s250, 4
          %s258 = int_to_ptr.vmem [resolvable:$true] %s257
          %260 = dma.hbm_to_vmem [thread:$0]  %s255, 64, %s258, %s247
        $region28: #{tpu_custom_call.1} parent=23 // pred_fallthru
          _
      $region24: #{tpu_custom_call.1} parent=5 // pred_fallthru
        _
      %p261 = scmp.le.s32.totalorder 1, %s26
      %p262 = scmp.lt.s32.totalorder %s26, 3
      %p263 = pnand %p261, %p262
      %p264 = pneg %p263
      // Predicated region
      $region29: #{tpu_custom_call.1} parent=5 // pred_check
        _
      $region30: #{tpu_custom_call.1} parent=5 // pred_check_branch
        %266 = sbr.rel (%p263) target = $region32
      $region31: #{tpu_custom_call.1} parent=5 // pred_region
        %s267 = ssub.s32 %s26, 1
        %s268 = sand.u32 %s39, 1
        %s269 = scalar_lea.sflag [#allocation4], %s268
        %s270 = sand.u32 %s39, 1
        %s271 = smul.addr %s270, 4
        %s272 = scalar_lea.vmem [#allocation3], %s271
        // Predicated region
        $region33: #{tpu_custom_call.1} parent=31 // pred_check
          %p273 = pneg %p52
        $region34: #{tpu_custom_call.1} parent=31 // pred_check_branch
          %275 = sbr.rel (%p273) target = $region36
        $region35: #{tpu_custom_call.1} parent=31 // pred_region
          %276 = dma.done %s269, 64
        $region36: #{tpu_custom_call.1} parent=31 // pred_fallthru
          _
        // Predicated region
        $region37: #{tpu_custom_call.1} parent=31 // pred_check
          %p277 = pneg %p73
        $region38: #{tpu_custom_call.1} parent=31 // pred_check_branch
          %279 = sbr.rel (%p277) target = $region40
        $region39: #{tpu_custom_call.1} parent=31 // pred_region
          %280 = dma.done [#allocation7], 3072
        $region40: #{tpu_custom_call.1} parent=31 // pred_fallthru
          _
        // Predicated region
        $region41: #{tpu_custom_call.1} parent=31 // pred_check
          %p281 = pneg %p94
        $region42: #{tpu_custom_call.1} parent=31 // pred_check_branch
          %283 = sbr.rel (%p281) target = $region44
        $region43: #{tpu_custom_call.1} parent=31 // pred_region
          %284 = dma.done [#allocation7], 1024
        $region44: #{tpu_custom_call.1} parent=31 // pred_fallthru
          _
        %s285 = sand.u32 %s39, 1
        %s286 = scalar_lea.sflag [#allocation4], %s285
        %s287 = sand.u32 %s39, 1
        %s288 = smul.addr %s287, 4
        %s289 = scalar_lea.vmem [#allocation3], %s288
        %p290 = pneg %p52
        %p291 = pneg %p49
        %p292 = pneg %p73
        %p293 = pneg %p70
        %p294 = pneg %p94
        %p295 = pneg %p91
        %p296 = pneg %p120
        %p297 = pneg %p117
        %s298 = sand.u32 %s107, 1
        %s299 = scalar_lea.sflag [#allocation5], %s298
        %s300 = sand.u32 %s107, 1
        %s301 = smul.addr %s300, 16
        %s302 = scalar_lea.vmem [#allocation9], %s301
        %p303 = pneg %p146
        %p304 = pneg %p143
        %s305 = sand.u32 %s31, 1
        %s306 = scalar_lea.sflag [#allocation11], %s305
        %s307 = sand.u32 %s133, 1
        %s308 = smul.addr %s307, 16
        %s309 = scalar_lea.vmem [#allocation10], %s308
        %p310 = pneg %p172
        %p311 = pneg %p169
        %s312 = sand.u32 %s31, 1
        %s313 = scalar_lea.sflag [#allocation11], %s312
        %s314 = sand.u32 %s159, 1
        %s315 = smul.addr %s314, 2
        %s316 = scalar_lea.vmem [#allocation12], %s315
        %p317 = pneg %p198
        %p318 = pneg %p195
        %s319 = sand.u32 %s185, 1
        %s320 = scalar_lea.sflag [#allocation14], %s319
        %s321 = sand.u32 %s185, 1
        %s322 = smul.addr %s321, 2
        %s323 = scalar_lea.vmem [#allocation13], %s322
        %v325 = vld [vmem:[%s272] sm:$0xf]
        %326 = vxpose.xlu0.b32.start [1/16] %v325, 128
        %327 = vxpose.xlu0.b32.cont [2/16] 0.0, 128
        %328 = vxpose.xlu0.b32.cont [3/16] 0.0, 128
        %329 = vxpose.xlu0.b32.cont [4/16] 0.0, 128
        %330 = vxpose.xlu0.b32.cont [5/16] 0.0, 128
        %331 = vxpose.xlu0.b32.cont [6/16] 0.0, 128
        %332 = vxpose.xlu0.b32.cont [7/16] 0.0, 128
        %333 = vxpose.xlu0.b32.cont [8/16] 0.0, 128
        %334 = vxpose.xlu0.b32.cont [9/16] 0.0, 128
        %335 = vxpose.xlu0.b32.cont [10/16] 0.0, 128
        %336 = vxpose.xlu0.b32.cont [11/16] 0.0, 128
        %337 = vxpose.xlu0.b32.cont [12/16] 0.0, 128
        %338 = vxpose.xlu0.b32.cont [13/16] 0.0, 128
        %339 = vxpose.xlu0.b32.cont [14/16] 0.0, 128
        %340 = vxpose.xlu0.b32.cont [15/16] 0.0, 128
        %341 = vxpose.xlu0.b32.end [16/16] 0.0, 128
        %v342 = vpop.trf.xlu0
        %v343 = vpop.trf.xlu0
        %v344 = vpop.trf.xlu0
        %v345 = vpop.trf.xlu0
        %v346 = vpop.trf.xlu0
        %v347 = vpop.trf.xlu0
        %v348 = vpop.trf.xlu0
        %v349 = vpop.trf.xlu0
        %v350 = vpop.trf.xlu0
        %v351 = vpop.trf.xlu0
        %v352 = vpop.trf.xlu0
        %v353 = vpop.trf.xlu0
        %v354 = vpop.trf.xlu0
        %v355 = vpop.trf.xlu0
        %v356 = vpop.trf.xlu0
        %v357 = vpop.trf.xlu0
        %358 = vst [vmem:[#allocation2] sm:$0xff] 0.0
        %359 = vst [vmem:[#allocation2 + $0x8] sm:$0xff] 0.0
        %360 = vst [vmem:[#allocation2 + $0x10] sm:$0x3] 0.0
        %vm361 = vcmask 31744
        %362 = vst.msk [vmem:[#allocation2 + $0x1] sm:$0xff] %vm361, %v342
        %363 = vst.msk [vmem:[#allocation2 + $0x9] sm:$0xff] %vm361, %v343
        %v364 = vld [vmem:[#allocation2] sm:$0xff]
        %v365 = vld [vmem:[#allocation2 + $0x8] sm:$0xff]
        %v366 = vld [vmem:[#allocation2 + $0x10] sm:$0x3]
        %vm370 = vcmask 1046528
        %v371 = vrot.slane %v364, 1
        %v372 = vrot.slane %v365, 1
        %v373 = vsel %vm370, %v371, %v372
        %v374 = vrot.slane %v366, 1
        %v375 = vsel %vm370, %v372, %v374
        %vm378 = vcmask 1045504
        %v379 = vrot.slane %v364, 2
        %v380 = vrot.slane %v365, 2
        %v381 = vsel %vm378, %v379, %v380
        %v382 = vrot.slane %v366, 2
        %v383 = vsel %vm378, %v380, %v382
        %v386 = vpack.c.bf16 %v365, %v364
        %v387 = vpack.c.bf16 %v375, %v373
        %v388 = vpack.c.bf16 %v383, %v381
        %v389 = vld [vmem:[#allocation6] sm:$0xf]
        %v390 = vld [vmem:[#allocation6 + $0x4] sm:$0xf]
        %v391 = vld [vmem:[#allocation6 + $0x8] sm:$0xf]
        %v392 = vld [vmem:[#allocation6 + $0xc] sm:$0xf]
        %v393 = vld [vmem:[#allocation6 + $0x10] sm:$0xf]
        %v394 = vld [vmem:[#allocation6 + $0x14] sm:$0xf]
        %v395 = vld [vmem:[#allocation6 + $0x18] sm:$0xf]
        %v396 = vld [vmem:[#allocation6 + $0x1c] sm:$0xf]
        %v397 = vld [vmem:[#allocation6 + $0x20] sm:$0xf]
        %v398 = vld [vmem:[#allocation6 + $0x24] sm:$0xf]
        %v399 = vld [vmem:[#allocation6 + $0x28] sm:$0xf]
        %v400 = vld [vmem:[#allocation6 + $0x2c] sm:$0xf]
        %v401 = vld [vmem:[#allocation6 + $0x30] sm:$0xf]
        %v402 = vld [vmem:[#allocation6 + $0x34] sm:$0xf]
        %v403 = vld [vmem:[#allocation6 + $0x38] sm:$0xf]
        %v404 = vld [vmem:[#allocation6 + $0x3c] sm:$0xf]
        %v405 = vld [vmem:[#allocation6 + $0x40] sm:$0xf]
        %v406 = vld [vmem:[#allocation6 + $0x44] sm:$0xf]
        %v407 = vld [vmem:[#allocation6 + $0x48] sm:$0xf]
        %v408 = vld [vmem:[#allocation6 + $0x4c] sm:$0xf]
        %v409 = vld [vmem:[#allocation6 + $0x50] sm:$0xf]
        %v410 = vld [vmem:[#allocation6 + $0x54] sm:$0xf]
        %v411 = vld [vmem:[#allocation6 + $0x58] sm:$0xf]
        %v412 = vld [vmem:[#allocation6 + $0x5c] sm:$0xf]
        %v413 = vld [vmem:[#allocation6 + $0x60] sm:$0xf]
        %v414 = vld [vmem:[#allocation6 + $0x64] sm:$0xf]
        %v415 = vld [vmem:[#allocation6 + $0x68] sm:$0xf]
        %v416 = vld [vmem:[#allocation6 + $0x6c] sm:$0xf]
        %v417 = vld [vmem:[#allocation6 + $0x70] sm:$0xf]
        %v418 = vld [vmem:[#allocation6 + $0x74] sm:$0xf]
        %v419 = vld [vmem:[#allocation6 + $0x78] sm:$0xf]
        %v420 = vld [vmem:[#allocation6 + $0x7c] sm:$0xf]
        %v421 = vld [vmem:[#allocation6 + $0x80] sm:$0xf]
        %v422 = vld [vmem:[#allocation6 + $0x84] sm:$0xf]
        %v423 = vld [vmem:[#allocation6 + $0x88] sm:$0xf]
        %v424 = vld [vmem:[#allocation6 + $0x8c] sm:$0xf]
        %v425 = vld [vmem:[#allocation6 + $0x90] sm:$0xf]
        %v426 = vld [vmem:[#allocation6 + $0x94] sm:$0xf]
        %v427 = vld [vmem:[#allocation6 + $0x98] sm:$0xf]
        %v428 = vld [vmem:[#allocation6 + $0x9c] sm:$0xf]
        %v429 = vld [vmem:[#allocation6 + $0xa0] sm:$0xf]
        %v430 = vld [vmem:[#allocation6 + $0xa4] sm:$0xf]
        %v431 = vld [vmem:[#allocation6 + $0xa8] sm:$0xf]
        %v432 = vld [vmem:[#allocation6 + $0xac] sm:$0xf]
        %v433 = vld [vmem:[#allocation6 + $0xb0] sm:$0xf]
        %v434 = vld [vmem:[#allocation6 + $0xb4] sm:$0xf]
        %v435 = vld [vmem:[#allocation6 + $0xb8] sm:$0xf]
        %v436 = vld [vmem:[#allocation6 + $0xbc] sm:$0xf]
        %v485 = vunpack.c.l.b16 %v389
        %v486 = vunpack.c.l.b16 %v390
        %v487 = vunpack.c.l.b16 %v391
        %v488 = vunpack.c.l.b16 %v392
        %v489 = vunpack.c.l.b16 %v393
        %v490 = vunpack.c.l.b16 %v394
        %v491 = vunpack.c.l.b16 %v395
        %v492 = vunpack.c.l.b16 %v396
        %v493 = vunpack.c.l.b16 %v397
        %v494 = vunpack.c.l.b16 %v398
        %v495 = vunpack.c.l.b16 %v399
        %v496 = vunpack.c.l.b16 %v400
        %v497 = vunpack.c.l.b16 %v401
        %v498 = vunpack.c.l.b16 %v402
        %v499 = vunpack.c.l.b16 %v403
        %v500 = vunpack.c.l.b16 %v404
        %v501 = vunpack.c.l.b16 %v405
        %v502 = vunpack.c.l.b16 %v406
        %v503 = vunpack.c.l.b16 %v407
        %v504 = vunpack.c.l.b16 %v408
        %v505 = vunpack.c.l.b16 %v409
        %v506 = vunpack.c.l.b16 %v410
        %v507 = vunpack.c.l.b16 %v411
        %v508 = vunpack.c.l.b16 %v412
        %v509 = vunpack.c.l.b16 %v413
        %v510 = vunpack.c.l.b16 %v414
        %v511 = vunpack.c.l.b16 %v415
        %v512 = vunpack.c.l.b16 %v416
        %v513 = vunpack.c.l.b16 %v417
        %v514 = vunpack.c.l.b16 %v418
        %v515 = vunpack.c.l.b16 %v419
        %v516 = vunpack.c.l.b16 %v420
        %v517 = vunpack.c.l.b16 %v421
        %v518 = vunpack.c.l.b16 %v422
        %v519 = vunpack.c.l.b16 %v423
        %v520 = vunpack.c.l.b16 %v424
        %v521 = vunpack.c.l.b16 %v425
        %v522 = vunpack.c.l.b16 %v426
        %v523 = vunpack.c.l.b16 %v427
        %v524 = vunpack.c.l.b16 %v428
        %v525 = vunpack.c.l.b16 %v429
        %v526 = vunpack.c.l.b16 %v430
        %v527 = vunpack.c.l.b16 %v431
        %v528 = vunpack.c.l.b16 %v432
        %v529 = vunpack.c.l.b16 %v433
        %v530 = vunpack.c.l.b16 %v434
        %v531 = vunpack.c.l.b16 %v435
        %v532 = vunpack.c.l.b16 %v436
        %v533 = vpack.c.b16 %v486, %v485
        %v534 = vpack.c.b16 %v488, %v487
        %v535 = vpack.c.b16 %v490, %v489
        %v536 = vpack.c.b16 %v492, %v491
        %v537 = vpack.c.b16 %v494, %v493
        %v538 = vpack.c.b16 %v496, %v495
        %v539 = vpack.c.b16 %v498, %v497
        %v540 = vpack.c.b16 %v500, %v499
        %v541 = vpack.c.b16 %v502, %v501
        %v542 = vpack.c.b16 %v504, %v503
        %v543 = vpack.c.b16 %v506, %v505
        %v544 = vpack.c.b16 %v508, %v507
        %v545 = vpack.c.b16 %v510, %v509
        %v546 = vpack.c.b16 %v512, %v511
        %v547 = vpack.c.b16 %v514, %v513
        %v548 = vpack.c.b16 %v516, %v515
        %v549 = vpack.c.b16 %v518, %v517
        %v550 = vpack.c.b16 %v520, %v519
        %v551 = vpack.c.b16 %v522, %v521
        %v552 = vpack.c.b16 %v524, %v523
        %v553 = vpack.c.b16 %v526, %v525
        %v554 = vpack.c.b16 %v528, %v527
        %v555 = vpack.c.b16 %v530, %v529
        %v556 = vpack.c.b16 %v532, %v531
        %581 = vmatprep.subr.bf16.mxu0 0
        %582 = vmatpush1.bf16.msra.mxu0 %v540
        %583 = vmatprep.subr.bf16.mxu0 0
        %584 = vmatpush1.bf16.msra.mxu0 %v539
        %585 = vmatprep.subr.bf16.mxu0 0
        %586 = vmatpush1.bf16.msra.mxu0 %v538
        %587 = vmatprep.subr.bf16.mxu0 0
        %588 = vmatpush1.bf16.msra.mxu0 %v537
        %589 = vmatprep.subr.bf16.mxu0 0
        %590 = vmatpush1.bf16.msra.mxu0 %v536
        %591 = vmatprep.subr.bf16.mxu0 0
        %592 = vmatpush1.bf16.msra.mxu0 %v535
        %593 = vmatprep.subr.bf16.mxu0 0
        %594 = vmatpush1.bf16.msra.mxu0 %v534
        %595 = vmatprep.subr.bf16.mxu0 0
        %596 = vmatpush1.bf16.msra.mxu0 %v533
        %597 = vmatprep.subr.bf16.mxu0 0
        %598 = vmatpush2.bf16.msra.mxu0 %v548
        %599 = vmatprep.subr.bf16.mxu0 0
        %600 = vmatpush2.bf16.msra.mxu0 %v547
        %601 = vmatprep.subr.bf16.mxu0 0
        %602 = vmatpush2.bf16.msra.mxu0 %v546
        %603 = vmatprep.subr.bf16.mxu0 0
        %604 = vmatpush2.bf16.msra.mxu0 %v545
        %605 = vmatprep.subr.bf16.mxu0 0
        %606 = vmatpush2.bf16.msra.mxu0 %v544
        %607 = vmatprep.subr.bf16.mxu0 0
        %608 = vmatpush2.bf16.msra.mxu0 %v543
        %609 = vmatprep.subr.bf16.mxu0 0
        %610 = vmatpush2.bf16.msra.mxu0 %v542
        %611 = vmatprep.subr.bf16.mxu0 0
        %612 = vmatpush2.bf16.msra.mxu0 %v541
        %613 = vmatprep.mubr.bf16.mxu0 %v387
        %614 = vmatmul.mubr.bf16.gmra.mxu0 %v386
        %v615 = vpop.f32.mrf.mxu0
        %v616 = vadd.f32 0.0, %v615
        %v617 = vpop.f32.mrf.mxu0
        %v618 = vpop.f32.mrf.mxu0
        %v619 = vadd.f32 0.0, %v618
        %v620 = vpop.f32.mrf.mxu0
        %621 = vdwg.mxu0
        %622 = vmatprep.subr.bf16.mxu0 0
        %623 = vmatpush1.bf16.msra.mxu0 %v556
        %624 = vmatprep.subr.bf16.mxu0 0
        %625 = vmatpush1.bf16.msra.mxu0 %v555
        %626 = vmatprep.subr.bf16.mxu0 0
        %627 = vmatpush1.bf16.msra.mxu0 %v554
        %628 = vmatprep.subr.bf16.mxu0 0
        %629 = vmatpush1.bf16.msra.mxu0 %v553
        %630 = vmatprep.subr.bf16.mxu0 0
        %631 = vmatpush1.bf16.msra.mxu0 %v552
        %632 = vmatprep.subr.bf16.mxu0 0
        %633 = vmatpush1.bf16.msra.mxu0 %v551
        %634 = vmatprep.subr.bf16.mxu0 0
        %635 = vmatpush1.bf16.msra.mxu0 %v550
        %636 = vmatprep.subr.bf16.mxu0 0
        %637 = vmatpush1.bf16.msra.mxu0 %v549
        %638 = vmatprep.subr.bf16.mxu0 0
        %639 = vmatpush2.bf16.msra.mxu0 0
        %640 = vmatprep.subr.bf16.mxu0 0
        %641 = vmatpush2.bf16.msra.mxu0 0
        %642 = vmatprep.subr.bf16.mxu0 0
        %643 = vmatpush2.bf16.msra.mxu0 0
        %644 = vmatprep.subr.bf16.mxu0 0
        %645 = vmatpush2.bf16.msra.mxu0 0
        %646 = vmatprep.subr.bf16.mxu0 0
        %647 = vmatpush2.bf16.msra.mxu0 0
        %648 = vmatprep.subr.bf16.mxu0 0
        %649 = vmatpush2.bf16.msra.mxu0 0
        %650 = vmatprep.subr.bf16.mxu0 0
        %651 = vmatpush2.bf16.msra.mxu0 0
        %652 = vmatprep.subr.bf16.mxu0 0
        %653 = vmatpush2.bf16.msra.mxu0 0
        %654 = vmatprep.mubr.bf16.mxu0 0
        %655 = vmatmul.mubr.bf16.gmra.mxu0 %v388
        %v656 = vpop.f32.mrf.mxu0
        %v657 = vadd.f32 %v616, %v656
        %v658 = vpop.f32.mrf.mxu0
        %v659 = vpop.f32.mrf.mxu0
        %v660 = vadd.f32 %v619, %v659
        %v661 = vpop.f32.mrf.mxu0
        %662 = vdwg.mxu0
        %663 = vst [vmem:[%s302] sm:$0xff] %v657
        %664 = vst [vmem:[%s302 + $0x8] sm:$0xff] %v660
        %v665 = vadd.f32 %v657, %v660
        %v666 = vrot.slane %v665, 4
        %v667 = vadd.f32 %v665, %v666
        %v668 = vrot.slane %v667, 2
        %v669 = vadd.f32 %v667, %v668
        %v670 = vrot.slane %v669, 1
        %v671 = vadd.f32 %v669, %v670
        %672 = vst [vmem:[%s316] sm:$0x1] %v671
        %v673 = vmul.f32 %v657, %v657
        %v674 = vmul.f32 %v660, %v660
        %v675 = vadd.f32 %v673, %v674
        %v676 = vrot.slane %v675, 4
        %v677 = vadd.f32 %v675, %v676
        %v678 = vrot.slane %v677, 2
        %v679 = vadd.f32 %v677, %v678
        %v680 = vrot.slane %v679, 1
        %v681 = vadd.f32 %v679, %v680
        %682 = vst [vmem:[%s316 + $0x1] sm:$0x1] %v681
        %v683 = vpack.c.bf16 %v366, %v366
        %v684 = vld [vmem:[#allocation8] sm:$0xf]
        %v685 = vld [vmem:[#allocation8 + $0x4] sm:$0xf]
        %v686 = vld [vmem:[#allocation8 + $0x8] sm:$0xf]
        %v687 = vld [vmem:[#allocation8 + $0xc] sm:$0xf]
        %v688 = vld [vmem:[#allocation8 + $0x10] sm:$0xf]
        %v689 = vld [vmem:[#allocation8 + $0x14] sm:$0xf]
        %v690 = vld [vmem:[#allocation8 + $0x18] sm:$0xf]
        %v691 = vld [vmem:[#allocation8 + $0x1c] sm:$0xf]
        %v692 = vld [vmem:[#allocation8 + $0x20] sm:$0xf]
        %v693 = vld [vmem:[#allocation8 + $0x24] sm:$0xf]
        %v694 = vld [vmem:[#allocation8 + $0x28] sm:$0xf]
        %v695 = vld [vmem:[#allocation8 + $0x2c] sm:$0xf]
        %v696 = vld [vmem:[#allocation8 + $0x30] sm:$0xf]
        %v697 = vld [vmem:[#allocation8 + $0x34] sm:$0xf]
        %v698 = vld [vmem:[#allocation8 + $0x38] sm:$0xf]
        %v699 = vld [vmem:[#allocation8 + $0x3c] sm:$0xf]
        %vm700 = vsmask.f32 7424
        %v702 = vshrl.u32 %v386, 16
        %v704 = vshll.u32 %v386, 16
        %v706 = vrot.slane %v704, 1
        %v707 = vor.u32 %v702, %v706
        %v709 = vshll.u32 %v683, 16
        %v711 = vrot.slane %v709, 1
        %v712 = vsel %vm700, %v707, %v711
        %v730 = vunpack.c.l.b16 %v684
        %v731 = vunpack.c.l.b16 %v685
        %v732 = vunpack.c.l.b16 %v686
        %v733 = vunpack.c.l.b16 %v687
        %v734 = vunpack.c.l.b16 %v688
        %v735 = vunpack.c.l.b16 %v689
        %v736 = vunpack.c.l.b16 %v690
        %v737 = vunpack.c.l.b16 %v691
        %v738 = vunpack.c.l.b16 %v692
        %v739 = vunpack.c.l.b16 %v693
        %v740 = vunpack.c.l.b16 %v694
        %v741 = vunpack.c.l.b16 %v695
        %v742 = vunpack.c.l.b16 %v696
        %v743 = vunpack.c.l.b16 %v697
        %v744 = vunpack.c.l.b16 %v698
        %v745 = vunpack.c.l.b16 %v699
        %v746 = vpack.c.b16 %v731, %v730
        %v747 = vpack.c.b16 %v733, %v732
        %v748 = vpack.c.b16 %v735, %v734
        %v749 = vpack.c.b16 %v737, %v736
        %v750 = vpack.c.b16 %v739, %v738
        %v751 = vpack.c.b16 %v741, %v740
        %v752 = vpack.c.b16 %v743, %v742
        %v753 = vpack.c.b16 %v745, %v744
        %762 = vmatprep.subr.bf16.mxu0 0
        %763 = vmatpush1.bf16.msra.mxu0 %v753
        %764 = vmatprep.subr.bf16.mxu0 0
        %765 = vmatpush1.bf16.msra.mxu0 %v752
        %766 = vmatprep.subr.bf16.mxu0 0
        %767 = vmatpush1.bf16.msra.mxu0 %v751
        %768 = vmatprep.subr.bf16.mxu0 0
        %769 = vmatpush1.bf16.msra.mxu0 %v750
        %770 = vmatprep.subr.bf16.mxu0 0
        %771 = vmatpush1.bf16.msra.mxu0 %v749
        %772 = vmatprep.subr.bf16.mxu0 0
        %773 = vmatpush1.bf16.msra.mxu0 %v748
        %774 = vmatprep.subr.bf16.mxu0 0
        %775 = vmatpush1.bf16.msra.mxu0 %v747
        %776 = vmatprep.subr.bf16.mxu0 0
        %777 = vmatpush1.bf16.msra.mxu0 %v746
        %778 = vmatprep.subr.bf16.mxu0 0
        %779 = vmatpush2.bf16.msra.mxu0 0
        %780 = vmatprep.subr.bf16.mxu0 0
        %781 = vmatpush2.bf16.msra.mxu0 0
        %782 = vmatprep.subr.bf16.mxu0 0
        %783 = vmatpush2.bf16.msra.mxu0 0
        %784 = vmatprep.subr.bf16.mxu0 0
        %785 = vmatpush2.bf16.msra.mxu0 0
        %786 = vmatprep.subr.bf16.mxu0 0
        %787 = vmatpush2.bf16.msra.mxu0 0
        %788 = vmatprep.subr.bf16.mxu0 0
        %789 = vmatpush2.bf16.msra.mxu0 0
        %790 = vmatprep.subr.bf16.mxu0 0
        %791 = vmatpush2.bf16.msra.mxu0 0
        %792 = vmatprep.subr.bf16.mxu0 0
        %793 = vmatpush2.bf16.msra.mxu0 0
        %794 = vmatprep.mubr.bf16.mxu0 0
        %795 = vmatmul.mubr.bf16.gmra.mxu0 %v712
        %v796 = vpop.f32.mrf.mxu0
        %v797 = vadd.f32 0.0, %v796
        %v798 = vpop.f32.mrf.mxu0
        %v799 = vpop.f32.mrf.mxu0
        %v800 = vadd.f32 0.0, %v799
        %v801 = vpop.f32.mrf.mxu0
        %802 = vdwg.mxu0
        %803 = vst [vmem:[%s309] sm:$0xff] %v797
        %804 = vst [vmem:[%s309 + $0x8] sm:$0xff] %v800
        %v805 = vadd.f32 %v797, %v800
        %v806 = vrot.slane %v805, 4
        %v807 = vadd.f32 %v805, %v806
        %v808 = vrot.slane %v807, 2
        %v809 = vadd.f32 %v807, %v808
        %v810 = vrot.slane %v809, 1
        %v811 = vadd.f32 %v809, %v810
        %812 = vst [vmem:[%s323] sm:$0x1] %v811
        %v813 = vmul.f32 %v797, %v797
        %v814 = vmul.f32 %v800, %v800
        %v815 = vadd.f32 %v813, %v814
        %v816 = vrot.slane %v815, 4
        %v817 = vadd.f32 %v815, %v816
        %v818 = vrot.slane %v817, 2
        %v819 = vadd.f32 %v817, %v818
        %v820 = vrot.slane %v819, 1
        %v821 = vadd.f32 %v819, %v820
        %822 = vst [vmem:[%s323 + $0x1] sm:$0x1] %v821
        %s823 = sand.u32 %s107, 1
        %s824 = scalar_lea.sflag [#allocation5], %s823
        %s825 = sand.u32 %s107, 1
        %s826 = smul.addr %s825, 16
        %s827 = scalar_lea.vmem [#allocation9], %s826
        %s828 = sand.u32 %s31, 1
        %s829 = scalar_lea.sflag [#allocation11], %s828
        %s830 = sand.u32 %s133, 1
        %s831 = smul.addr %s830, 16
        %s832 = scalar_lea.vmem [#allocation10], %s831
        %s833 = sand.u32 %s31, 1
        %s834 = scalar_lea.sflag [#allocation11], %s833
        %s835 = sand.u32 %s159, 1
        %s836 = smul.addr %s835, 2
        %s837 = scalar_lea.vmem [#allocation12], %s836
        %s838 = sand.u32 %s185, 1
        %s839 = scalar_lea.sflag [#allocation14], %s838
        %s840 = sand.u32 %s185, 1
        %s841 = smul.addr %s840, 2
        %s842 = scalar_lea.vmem [#allocation13], %s841
        // Predicated region
        $region45: #{tpu_custom_call.1} parent=31 // pred_check
          %p843 = pneg %p117
        $region46: #{tpu_custom_call.1} parent=31 // pred_check_branch
          %845 = sbr.rel (%p843) target = $region48
        $region47: #{tpu_custom_call.1} parent=31 // pred_region
          %s847 = ssub.s32 256, 256
          %848 = vsyncadd %s824, %s847
          %s849 = smul.addr %s31, 2
          %s850 = smul.addr %s849, 128
          %s851 = scalar_lea.hbm %s3, %s850
          %s852 = sshll.u32 %s827, 4
          %s853 = int_to_ptr.vmem [resolvable:$true] %s852
          %858 = dma.vmem_to_hbm [thread:$0]  %s853, 256, %s851, %s824, 128, 128, 8
        $region48: #{tpu_custom_call.1} parent=31 // pred_fallthru
          _
        // Predicated region
        $region49: #{tpu_custom_call.1} parent=31 // pred_check
          %p859 = pneg %p143
        $region50: #{tpu_custom_call.1} parent=31 // pred_check_branch
          %861 = sbr.rel (%p859) target = $region52
        $region51: #{tpu_custom_call.1} parent=31 // pred_region
          %s863 = ssub.s32 256, 256
          %864 = vsyncadd %s829, %s863
          %s865 = smul.addr %s31, 2
          %s866 = smul.addr %s865, 128
          %s867 = scalar_lea.hbm %s4, %s866
          %s868 = sshll.u32 %s832, 4
          %s869 = int_to_ptr.vmem [resolvable:$true] %s868
          %874 = dma.vmem_to_hbm [thread:$0]  %s869, 256, %s867, %s829, 128, 128, 8
        $region52: #{tpu_custom_call.1} parent=31 // pred_fallthru
          _
        // Predicated region
        $region53: #{tpu_custom_call.1} parent=31 // pred_check
          %p875 = pneg %p169
        $region54: #{tpu_custom_call.1} parent=31 // pred_check_branch
          %877 = sbr.rel (%p875) target = $region56
        $region55: #{tpu_custom_call.1} parent=31 // pred_region
          %s879 = ssub.s32 32, 32
          %880 = vsyncadd %s834, %s879
          %s881 = smul.addr %s31, 32
          %s882 = scalar_lea.hbm %s5, %s881
          %s884 = sshll.u32 %s837, 4
          %s885 = int_to_ptr.vmem [resolvable:$true] %s884
          %887 = dma.vmem_to_hbm [thread:$0]  %s885, 32, %s882, %s834
        $region56: #{tpu_custom_call.1} parent=31 // pred_fallthru
          _
        // Predicated region
        $region57: #{tpu_custom_call.1} parent=31 // pred_check
          %p888 = pneg %p195
        $region58: #{tpu_custom_call.1} parent=31 // pred_check_branch
          %890 = sbr.rel (%p888) target = $region60
        $region59: #{tpu_custom_call.1} parent=31 // pred_region
          %s892 = ssub.s32 32, 32
          %893 = vsyncadd %s839, %s892
          %s894 = smul.addr %s31, 32
          %s895 = scalar_lea.hbm %s6, %s894
          %s897 = sshll.u32 %s842, 4
          %s898 = int_to_ptr.vmem [resolvable:$true] %s897
          %900 = dma.vmem_to_hbm [thread:$0]  %s898, 32, %s895, %s839
        $region60: #{tpu_custom_call.1} parent=31 // pred_fallthru
          _
      $region32: #{tpu_custom_call.1} parent=5 // pred_fallthru
        _
      %p901 = scmp.le.s32.totalorder 2, %s26
      // Predicated region
      $region61: #{tpu_custom_call.1} parent=5 // pred_check
        %p902 = pneg %p901
      $region62: #{tpu_custom_call.1} parent=5 // pred_check_branch
        %904 = sbr.rel (%p902) target = $region64
      $region63: #{tpu_custom_call.1} parent=5 // pred_region
        %s905 = ssub.s32 %s26, 2
        // Predicated region
        $region65: #{tpu_custom_call.1} parent=63 // pred_check
          %p906 = pneg %p123
        $region66: #{tpu_custom_call.1} parent=63 // pred_check_branch
          %908 = sbr.rel (%p906) target = $region68
        $region67: #{tpu_custom_call.1} parent=63 // pred_region
          %s909 = sand.u32 %s108, 1
          %s910 = scalar_lea.sflag [#allocation5], %s909
          %s911 = sand.u32 %s108, 1
          %s912 = smul.addr %s911, 16
          %s913 = scalar_lea.vmem [#allocation9], %s912
          %914 = dma.done %s910, 256
        $region68: #{tpu_custom_call.1} parent=63 // pred_fallthru
          _
        // Predicated region
        $region69: #{tpu_custom_call.1} parent=63 // pred_check
          %p915 = pneg %p149
        $region70: #{tpu_custom_call.1} parent=63 // pred_check_branch
          %917 = sbr.rel (%p915) target = $region72
        $region71: #{tpu_custom_call.1} parent=63 // pred_region
          %s918 = sand.u32 %s32, 1
          %s919 = scalar_lea.sflag [#allocation11], %s918
          %s920 = sand.u32 %s134, 1
          %s921 = smul.addr %s920, 16
          %s922 = scalar_lea.vmem [#allocation10], %s921
          %923 = dma.done %s919, 256
        $region72: #{tpu_custom_call.1} parent=63 // pred_fallthru
          _
        // Predicated region
        $region73: #{tpu_custom_call.1} parent=63 // pred_check
          %p924 = pneg %p175
        $region74: #{tpu_custom_call.1} parent=63 // pred_check_branch
          %926 = sbr.rel (%p924) target = $region76
        $region75: #{tpu_custom_call.1} parent=63 // pred_region
          %s927 = sand.u32 %s32, 1
          %s928 = scalar_lea.sflag [#allocation11], %s927
          %s929 = sand.u32 %s160, 1
          %s930 = smul.addr %s929, 2
          %s931 = scalar_lea.vmem [#allocation12], %s930
          %932 = dma.done %s928, 32
        $region76: #{tpu_custom_call.1} parent=63 // pred_fallthru
          _
        // Predicated region
        $region77: #{tpu_custom_call.1} parent=63 // pred_check
          %p933 = pneg %p201
        $region78: #{tpu_custom_call.1} parent=63 // pred_check_branch
          %935 = sbr.rel (%p933) target = $region80
        $region79: #{tpu_custom_call.1} parent=63 // pred_region
          %s936 = sand.u32 %s186, 1
          %s937 = scalar_lea.sflag [#allocation14], %s936
          %s938 = sand.u32 %s186, 1
          %s939 = smul.addr %s938, 2
          %s940 = scalar_lea.vmem [#allocation13], %s939
          %941 = dma.done %s937, 32
        $region80: #{tpu_custom_call.1} parent=63 // pred_fallthru
          _
      $region64: #{tpu_custom_call.1} parent=5 // pred_fallthru
        _
    $region6: #{tpu_custom_call.1} parent=1 // loop_footer
      %s30 = sadd.s32 1, %s26
    $region7: #{tpu_custom_call.1} parent=1 // loop_footer_branch
      %25 = sbr.rel target = $region3
    $region8: #{tpu_custom_call.1} parent=1 // loop_exit
      _
    %942 = vsyncpa [#allocation4], 1
    %s943 = scalar_lea.sflag [#allocation4], 1
    %944 = vsyncpa %s943, 1
    %945 = vsyncpa [#allocation7], 1
    %946 = vsyncpa [#allocation5], 1
    %s947 = scalar_lea.sflag [#allocation5], 1
    %948 = vsyncpa %s947, 1
    %949 = vsyncpa [#allocation11], 1
    %s950 = scalar_lea.sflag [#allocation11], 1
    %951 = vsyncpa %s950, 1
    %952 = vsyncpa [#allocation14], 1
    %s953 = scalar_lea.sflag [#allocation14], 1
    %954 = vsyncpa %s953, 1

</llo_original>
